<compile_context>
chip_gen: v7x
topology: tpu7x:2x2x1
jax: 0.10.0
libtpu: 0.0.40
codegen_flags: <defaults>
</compile_context>

<pallas_src>
import functools
import numpy as np
import jax
import jax.numpy as jnp
from jax.experimental import pallas as pl
from jax.experimental.pallas import tpu as pltpu

# --------------------------- small test configuration ------------------------
# TODO(synk): scaled-down config (original: IMG=448, C=2048, 7x7 features,
# 16384-wide classifiers).  Ratios / wiring are preserved.
IMG = 32                 # input spatial size
PART = 32                # part crop size (fixed-size anchors, no resize)
PAD = 32                 # F.pad pad_side analogue
PATCH = 8                # stub backbone patch size
FH = FW = IMG // PATCH   # 4x4 backbone feature map
S = FH * FW              # 16 spatial positions (= FRE spa channel count)
C = 256                  # backbone channels
TOPN = 7
CAT_NUM = 7
NUM_CLASSES = 59
CLS1_HID = 448
PART_HID = 512
CAT_IN = (CAT_NUM + 1) * C          # 2048  (concat_net input)
CAT_HID = (CAT_NUM + 1) * C         # 2048  (concat_net hidden)
GCN_L = 128                          # Liner width == GCN sequence length
GCN_CH = CAT_IN // GCN_L             # 16    (GCN conv1d channels)
GCN_PROJ = 64                        # conv_q1/k1 projection (only its mean is used)
GCN_HID = 1280                       # GCN classifier hidden
BN_EPS = 1e-5

_A2 = (FH + 2 - 3) // 2 + 1          # ProposalNet down2 spatial (=2)
_A3 = (_A2 + 2 - 3) // 2 + 1         # ProposalNet down3 spatial (=1)
NUM_ANCHORS = 6 * FH * FW + 6 * _A2 * _A2 + 9 * _A3 * _A3   # == rpn_score width


# ------------------------------- Pallas kernels -------------------------------
def _matmul_kernel(a_ref, b_ref, bias_ref, o_ref, *, act):
    # Full-K resident A block, N-tiled B block, fp32 accumulation + epilogue.
    r = jnp.dot(a_ref[...], b_ref[...], preferred_element_type=jnp.float32)
    r = r + bias_ref[...]
    if act == "relu":
        r = jnp.maximum(r, 0.0)
    elif act == "elu":
        r = jnp.where(r > 0, r, jnp.exp(r) - 1.0)
    o_ref[...] = r


def _bmm_t_kernel(a_ref, b_ref, o_ref):
    # out[g] = a[g]^T @ b[g]   (contract the leading J axis of both operands)
    o_ref[0] = jax.lax.dot_general(
        a_ref[0], b_ref[0],
        dimension_numbers=(((0,), (0,)), ((), ())),
        preferred_element_type=jnp.float32)


def _pool_kernel(x_ref, o_ref, *, op, inv):
    # Reduce the spatial axis of an NHWC slab; output is lane-dense (1, C).
    x = x_ref[0].astype(jnp.float32)                     # (S, C)
    if op == "max":
        o_ref[0] = jnp.max(x, axis=0, keepdims=True)
    else:
        o_ref[0] = jnp.sum(x, axis=0, keepdims=True) * inv


def _gcn_attn_kernel(q_ref, k_ref, adj_ref, alpha_ref, o_ref):
    diff = q_ref[0] - k_ref[0]                           # (L,1)-(1,L) -> (L,L)
    o_ref[0] = adj_ref[...] + jnp.tanh(diff) * alpha_ref[...]


# ------------------------------ Pallas wrappers --------------------------------
def _round_up(n, m):
    return ((n + m - 1) // m) * m


def pallas_matmul(a, w, bias=None, act="none"):
    """act(A @ W + bias); A/W streamed to the MXU in bf16, fp32 accumulate."""
    M, K = a.shape
    Kw, N = w.shape
    assert K == Kw
    if bias is None:
        bias = jnp.zeros((N,), jnp.float32)
    Mp = _round_up(max(M, 16), 16)
    Kp = _round_up(K, 128)
    Np = _round_up(N, 128)
    a_p = jnp.pad(a.astype(jnp.bfloat16), ((0, Mp - M), (0, Kp - K)))
    w_p = jnp.pad(w.astype(jnp.bfloat16), ((0, Kp - K), (0, Np - N)))
    b_p = jnp.pad(bias.astype(jnp.float32).reshape(1, N), ((0, 0), (0, Np - N)))
    bn = 512 if Np % 512 == 0 else (256 if Np % 256 == 0 else 128)
    out = pl.pallas_call(
        functools.partial(_matmul_kernel, act=act),
        out_shape=jax.ShapeDtypeStruct((Mp, Np), jnp.float32),
        grid_spec=pltpu.PrefetchScalarGridSpec(
            num_scalar_prefetch=0,
            grid=(Np // bn,),
            in_specs=[pl.BlockSpec((Mp, Kp), lambda n: (0, 0)),   # A resident
                      pl.BlockSpec((Kp, bn), lambda n: (0, n)),
                      pl.BlockSpec((1, bn), lambda n: (0, n))],
            out_specs=pl.BlockSpec((Mp, bn), lambda n: (0, n))),
        compiler_params=pltpu.CompilerParams(
            dimension_semantics=("parallel",)),
    )(a_p, w_p, b_p)
    return out[:M, :N]


def pallas_bmm_t(a, b):
    """Batched out[g] = a[g]^T @ b[g];  a: (G,J,P), b: (G,J,Q) -> (G,P,Q) fp32."""
    G, J, P = a.shape
    Q = b.shape[2]
    return pl.pallas_call(
        _bmm_t_kernel,
        out_shape=jax.ShapeDtypeStruct((G, P, Q), jnp.float32),
        grid_spec=pltpu.PrefetchScalarGridSpec(
            num_scalar_prefetch=0, grid=(G,),
            in_specs=[pl.BlockSpec((1, J, P), lambda g: (g, 0, 0)),
                      pl.BlockSpec((1, J, Q), lambda g: (g, 0, 0))],
            out_specs=pl.BlockSpec((1, P, Q), lambda g: (g, 0, 0))),
        compiler_params=pltpu.CompilerParams(dimension_semantics=("parallel",)),
    )(a.astype(jnp.bfloat16), b.astype(jnp.bfloat16))


def pallas_pool(x, op):
    """x: (R, S, C) -> (R, C) mean/max over the S axis (lane-dense output)."""
    R, Sx, Cx = x.shape
    out = pl.pallas_call(
        functools.partial(_pool_kernel, op=op, inv=1.0 / Sx),
        out_shape=jax.ShapeDtypeStruct((R, 1, Cx), jnp.float32),
        grid_spec=pltpu.PrefetchScalarGridSpec(
            num_scalar_prefetch=0, grid=(R,),
            in_specs=[pl.BlockSpec((1, Sx, Cx), lambda r: (r, 0, 0))],
            out_specs=pl.BlockSpec((1, 1, Cx), lambda r: (r, 0, 0))),
        compiler_params=pltpu.CompilerParams(dimension_semantics=("parallel",)),
    )(x.astype(jnp.float32))
    return out.reshape(R, Cx)


def pallas_gcn_attn(q, k, adj, alpha):
    """A1 = adj + tanh(q - k^T) * alpha, per batch."""
    B, L, _ = q.shape
    alpha2 = jnp.reshape(alpha, (1, 1)).astype(jnp.float32)
    return pl.pallas_call(
        _gcn_attn_kernel,
        out_shape=jax.ShapeDtypeStruct((B, L, L), jnp.float32),
        grid_spec=pltpu.PrefetchScalarGridSpec(
            num_scalar_prefetch=0, grid=(B,),
            in_specs=[pl.BlockSpec((1, L, 1), lambda b: (b, 0, 0)),
                      pl.BlockSpec((1, 1, L), lambda b: (b, 0, 0)),
                      pl.BlockSpec((L, L), lambda b: (0, 0)),
                      pl.BlockSpec((1, 1), lambda b: (0, 0))],
            out_specs=pl.BlockSpec((1, L, L), lambda b: (b, 0, 0))),
        compiler_params=pltpu.CompilerParams(dimension_semantics=("parallel",)),
    )(q.astype(jnp.float32), k.astype(jnp.float32),
      adj.astype(jnp.float32), alpha2)


# ------------------------------- conv helpers ---------------------------------
def im2col_nhwc(x, ksize, stride, padding):
    B, H, W, Cin = x.shape
    xp = jnp.pad(x, ((0, 0), (padding, padding), (padding, padding), (0, 0)))
    Ho = (H + 2 * padding - ksize) // stride + 1
    Wo = (W + 2 * padding - ksize) // stride + 1
    cols = []
    for kh in range(ksize):
        for kw in range(ksize):
            cols.append(xp[:, kh:kh + stride * Ho:stride,
                           kw:kw + stride * Wo:stride, :])
    col = jnp.concatenate(cols, axis=-1)                  # (B,Ho,Wo,k*k*Cin)
    return col.reshape(B * Ho * Wo, ksize * ksize * Cin), Ho, Wo


def conv2d_nhwc(x, w_mat, bias, ksize, stride, padding, act="none"):
    # TODO(synk): im2col is materialized in XLA (not fused into the matmul);
    # at this scale it is a few KB.
    B, H, W, Cin = x.shape
    if ksize == 1 and stride == 1 and padding == 0:
        cols, Ho, Wo = x.reshape(B * H * W, Cin), H, W
    else:
        cols, Ho, Wo = im2col_nhwc(x, ksize, stride, padding)
    out = pallas_matmul(cols, w_mat, bias, act)
    return out.reshape(B, Ho, Wo, w_mat.shape[1])


# ----------------------------- parameter set-up --------------------------------
def _bn_default(n):
    return (jnp.ones(n, jnp.float32), jnp.zeros(n, jnp.float32),
            jnp.zeros(n, jnp.float32), jnp.ones(n, jnp.float32))


def fold_bn_after(w, bias, bn):
    g, bt, m, v = bn
    s = g / jnp.sqrt(v + BN_EPS)
    return w * s[None, :], (bias - m) * s + bt


def fold_bn_before(w, bias, bn):
    g, bt, m, v = bn
    a = g / jnp.sqrt(v + BN_EPS)
    c = bt - m * a
    return w * a[:, None], bias + c @ w


def init_params(key):
    ks = iter(jax.random.split(key, 64))

    def w(fi, fo):
        return jax.random.normal(next(ks), (fi, fo), jnp.float32) / np.sqrt(fi)

    def b(n):
        return 0.01 * jax.random.normal(next(ks), (n,), jnp.float32)

    bf16 = lambda t: t.astype(jnp.bfloat16)

    p = {}
    # TODO(synk): resnet50 backbone unavailable -> deterministic patch embedding.
    p["patch_w"], p["patch_b"] = bf16(w(3 * PATCH * PATCH, C)), b(C)

    # FRE (small-spatial branch: spa1 -> fc11 -> relu -> fc22 -> bmm).
    p["fre"] = {"spa1_w": bf16(w(C, S)), "spa1_b": b(S),
                "fc11_w": bf16(w(S, S)), "fc22_w": bf16(w(S, C))}

    # conv_block1: BasicConv(C,448,1) + BasicConv(448,C//2,3)  (BN folded).
    cw, cb = fold_bn_after(w(C, CLS1_HID), jnp.zeros(CLS1_HID, jnp.float32),
                           _bn_default(CLS1_HID))
    p["cb1_w"], p["cb1_b"] = bf16(cw), cb
    cw, cb = fold_bn_after(w(CLS1_HID * 9, C // 2), jnp.zeros(C // 2, jnp.float32),
                           _bn_default(C // 2))
    p["cb2_w"], p["cb2_b"] = bf16(cw), cb

    # classifier1: BN -> Linear -> BN -> ELU -> Dropout -> Linear  (BN folded).
    w1, b1 = fold_bn_before(w(C // 2, CLS1_HID), b(CLS1_HID), _bn_default(C // 2))
    w1, b1 = fold_bn_after(w1, b1, _bn_default(CLS1_HID))
    p["cls1_w1"], p["cls1_b1"] = bf16(w1), b1
    p["cls1_w2"], p["cls1_b2"] = bf16(w(CLS1_HID, NUM_CLASSES)), b(NUM_CLASSES)

    # ProposalNet
    p["down1_w"], p["down1_b"] = bf16(w(C * 9, 128)), b(128)
    p["down2_w"], p["down2_b"] = bf16(w(128 * 9, 128)), b(128)
    p["down3_w"], p["down3_b"] = bf16(w(128 * 9, 128)), b(128)
    p["tidy1_w"], p["tidy1_b"] = bf16(w(128, 6)), b(6)
    p["tidy2_w"], p["tidy2_b"] = bf16(w(128, 6)), b(6)
    p["tidy3_w"], p["tidy3_b"] = bf16(w(128, 9)), b(9)

    # concat_net / Liner / partcls_net
    p["cat_w1"], p["cat_b1"] = bf16(w(CAT_IN, CAT_HID)), b(CAT_HID)
    p["cat_w2"], p["cat_b2"] = bf16(w(CAT_HID, NUM_CLASSES)), b(NUM_CLASSES)
    p["liner_w"], p["liner_b"] = bf16(w(GCN_L, GCN_L)), b(GCN_L)
    p["part_w1"], p["part_b1"] = bf16(w(C, PART_HID)), b(PART_HID)
    p["part_w2"], p["part_b2"] = bf16(w(PART_HID, NUM_CLASSES)), b(NUM_CLASSES)

    # GCN combiner
    gcn = {}
    gcn["adj1"] = jnp.eye(GCN_L, dtype=jnp.float32) / 100.0 + 1.0 / 100.0
    gcn["alpha1"] = jnp.zeros((), jnp.float32)
    gcn["w1"], gcn["b1"] = bf16(w(GCN_CH, GCN_CH)), b(GCN_CH)
    wq, bq = w(GCN_CH, GCN_PROJ), b(GCN_PROJ)
    wk, bk = w(GCN_CH, GCN_PROJ), b(GCN_PROJ)
    # conv_q1(x).mean(1) == x @ mean_o(Wq) + mean(bq)  -> fold into 2-col matmul.
    gcn["wqk_mean"] = bf16(jnp.stack([wq.mean(axis=1), wk.mean(axis=1)], axis=1))
    gcn["bqk_mean"] = jnp.stack([bq.mean(), bk.mean()])
    gcn["bn"] = _bn_default(GCN_CH)
    gcn["cls_w1"], gcn["cls_b1"] = bf16(w(GCN_CH * GCN_L, GCN_HID)), b(GCN_HID)
    gcn["cls_w2"], gcn["cls_b2"] = bf16(w(GCN_HID, NUM_CLASSES)), b(NUM_CLASSES)
    p["gcn"] = gcn

    # TODO(synk): generate_default_anchor_maps + hard_nms unavailable
    # -> deterministic anchor grid, selection via plain top-k.
    idx = np.arange(NUM_ANCHORS)
    maxoff = 2 * PAD + IMG - PART
    p["anchor_y"] = jnp.asarray((idx * 31) % (maxoff + 1), jnp.int32)
    p["anchor_x"] = jnp.asarray((idx * 47) % (maxoff + 1), jnp.int32)
    return p


# --------------------------------- sub-nets ------------------------------------
def backbone(p, x_nchw):
    # TODO(synk): stands in for resnet.resnet50(pretrained=True) features.
    B, Ci, H, W = x_nchw.shape
    hp, wp = H // PATCH, W // PATCH
    t = x_nchw.reshape(B, Ci, hp, PATCH, wp, PATCH).transpose(0, 2, 4, 1, 3, 5)
    patches = t.reshape(B * hp * wp, Ci * PATCH * PATCH)
    feat = pallas_matmul(patches, p["patch_w"], p["patch_b"], act="relu")
    return feat.reshape(B, hp, wp, C)                      # NHWC


def fre_forward(fp, x_nhwc):
    # FRE small branch: spa1 -> fc11 -> relu -> fc22 -> bmm (output kept NHWC).
    B, H, W, Cx = x_nhwc.shape
    Ssp = H * W
    assert Ssp == S
    xf = x_nhwc.reshape(B * Ssp, Cx)
    emb = pallas_matmul(xf, fp["spa1_w"], fp["spa1_b"])    # (B*S, S)  "embedding"
    hba = pallas_matmul(emb, fp["fc11_w"], None, act="relu")   # dropout eval = id
    img = pallas_matmul(hba, fp["fc22_w"], None)           # (B*S, C)  "_img" (pre-T)
    out = pallas_bmm_t(emb.reshape(B, Ssp, Ssp),           # emb^T @ img == NHWC out
                       img.reshape(B, Ssp, Cx))
    return out.reshape(B, H, W, Cx)


def gcn_forward(g, lin):
    # lin: (B, GCN_CH, GCN_L) in torch terms; stored here as (B, GCN_CH, GCN_L).
    B = lin.shape[0]
    xt = lin.transpose(0, 2, 1).reshape(B * GCN_L, GCN_CH)     # rows = (b, l)
    qk = pallas_matmul(xt, g["wqk_mean"], g["bqk_mean"])       # folded channel-mean
    q1 = qk[:, 0].reshape(B, GCN_L, 1)
    k1 = qk[:, 1].reshape(B, 1, GCN_L)
    A1 = pallas_gcn_attn(q1, k1, g["adj1"], g["alpha1"])       # (B, L, L)
    hs_t = pallas_matmul(xt, g["w1"], g["b1"]).reshape(B, GCN_L, GCN_CH)  # conv1
    hs_t = pallas_bmm_t(A1, hs_t)                              # == (hs @ A1)^T
    gm, gb, m, v = g["bn"]                                     # BatchNorm1d, eval
    a = gm / jnp.sqrt(v + BN_EPS)
    hs_t = hs_t * a[None, None, :] + (gb - m * a)[None, None, :]
    hs = hs_t.transpose(0, 2, 1).reshape(B, GCN_CH * GCN_L)    # torch flatten order
    h = pallas_matmul(hs, g["cls_w1"], g["cls_b1"], act="elu") # dropout eval = id
    return pallas_matmul(h, g["cls_w2"], g["cls_b2"])


# ------------------------------ FREGNet forward ---------------------------------
def freg_forward(p, x):
    B = x.shape[0]
    rpn_feature = backbone(p, x)                               # (B, 4, 4, C) NHWC
    resnet_map = fre_forward(p["fre"], rpn_feature)            # FRE, NHWC

    feat = pallas_pool(resnet_map.reshape(B, S, C), "mean")    # avgpool -> (B, C)
    feature11 = feat.reshape(B, 1, C)
    feature1 = feat                                            # Dropout eval = id

    cb1 = conv2d_nhwc(resnet_map, p["cb1_w"], p["cb1_b"], 1, 1, 0, act="relu")
    cb2 = conv2d_nhwc(cb1, p["cb2_w"], p["cb2_b"], 3, 1, 1, act="relu")
    gmp = pallas_pool(cb2.reshape(B, S, C // 2), "max")        # AdaptiveMaxPool2d(1)
    h = pallas_matmul(gmp, p["cls1_w1"], p["cls1_b1"], act="elu")
    raw_logits = pallas_matmul(h, p["cls1_w2"], p["cls1_b2"])

    # ProposalNet (detach ~ forward-identical).  NHWC flatten order differs from
    # torch's NCHW flatten; consistent with the stubbed anchor indexing. TODO(synk)
    d1 = conv2d_nhwc(rpn_feature, p["down1_w"], p["down1_b"], 3, 1, 1, act="relu")
    d2 = conv2d_nhwc(d1, p["down2_w"], p["down2_b"], 3, 2, 1, act="relu")
    d3 = conv2d_nhwc(d2, p["down3_w"], p["down3_b"], 3, 2, 1, act="relu")
    t1 = conv2d_nhwc(d1, p["tidy1_w"], p["tidy1_b"], 1, 1, 0).reshape(B, -1)
    t2 = conv2d_nhwc(d2, p["tidy2_w"], p["tidy2_b"], 1, 1, 0).reshape(B, -1)
    t3 = conv2d_nhwc(d3, p["tidy3_w"], p["tidy3_b"], 1, 1, 0).reshape(B, -1)
    rpn_score = jnp.concatenate([t1, t2, t3], axis=1)          # (B, NUM_ANCHORS)

    # TODO(synk): hard_nms over edge anchors replaced by plain top-k.
    top_n_prob, top_n_index = jax.lax.top_k(rpn_score, TOPN)

    # Part crops: gather directly from the padded image (no jnp.repeat).
    x_pad = jnp.pad(x, ((0, 0), (0, 0), (PAD, PAD), (PAD, PAD)))
    ys = jnp.take(p["anchor_y"], top_n_index).reshape(-1)
    xs = jnp.take(p["anchor_x"], top_n_index).reshape(-1)
    b_idx = jnp.repeat(jnp.arange(B, dtype=jnp.int32), TOPN)
    zero = jnp.int32(0)
    part_imgs = jax.vmap(
        lambda bi, y0, x0: jax.lax.dynamic_slice(
            x_pad, (bi, zero, y0, x0), (1, 3, PART, PART))[0]
    )(b_idx, ys, xs)                                           # (B*TOPN, 3, PART, PART)

    part_map = backbone(p, part_imgs)
    part_map = fre_forward(p["fre"], part_map)                 # TODO(synk): ASM undefined; FRE stand-in.
    part_features = pallas_pool(part_map.reshape(B * TOPN, S, C), "mean")

    part_feature = part_features.reshape(B, TOPN, C)[:, :CAT_NUM]
    part_feature1 = part_feature.reshape(B, -1)
    concat_out = jnp.concatenate([part_feature1, feature1], axis=1)        # (B, CAT_IN)
    concat_out1 = jnp.concatenate([part_feature, feature11],
                                  axis=1).reshape(B, -1, GCN_L)            # (B, GCN_CH, GCN_L)

    lin = pallas_matmul(concat_out1.reshape(-1, GCN_L),
                        p["liner_w"], p["liner_b"]).reshape(B, GCN_CH, GCN_L)
    ch = pallas_matmul(concat_out, p["cat_w1"], p["cat_b1"], act="elu")
    concat_logits1 = pallas_matmul(ch, p["cat_w2"], p["cat_b2"])
    concat_logits = gcn_forward(p["gcn"], lin)

    ph = pallas_matmul(part_features, p["part_w1"], p["part_b1"], act="elu")
    part_logits = pallas_matmul(ph, p["part_w2"], p["part_b2"]).reshape(B, TOPN, -1)

    return [raw_logits, concat_logits, concat_logits1, part_logits,
            top_n_index, top_n_prob]


# ------------------------------------ main --------------------------------------
if __name__ == "__main__":
    key = jax.random.PRNGKey(0)
    kx, kp = jax.random.split(key)
    x = jax.random.normal(kx, (2, 3, IMG, IMG), jnp.float32)
    params = init_params(kp)

    outs = freg_forward(params, x)
    jax.block_until_ready(outs)

    assert outs[0].shape == (2, NUM_CLASSES)
    assert outs[1].shape == (2, NUM_CLASSES)
    assert outs[2].shape == (2, NUM_CLASSES)
    assert outs[3].shape == (2, TOPN, NUM_CLASSES)
    assert outs[4].shape == (2, TOPN)
    assert outs[5].shape == (2, TOPN)
    print("KERNEL_OK")
</pallas_src>

<mosaic_0001>
module attributes {stable_mosaic.version = 11 : i64} {
  func.func @_matmul_kernel(%arg0: i32, %arg1: memref<32x256xbf16, #tpu.memory_space<vmem>>, %arg2: memref<256x256xbf16, #tpu.memory_space<vmem>>, %arg3: memref<1x256xf32, #tpu.memory_space<vmem>>, %arg4: memref<32x256xf32, #tpu.memory_space<vmem>>) attributes {dimension_semantics = [#tpu.dimension_semantics<parallel>], iteration_bounds = array<i64: 1>, scalar_prefetch = 0 : i64, scratch_operands = 0 : i64, tpu.core_type = #tpu.core_type<tc>, window_params = [{pipeline_mode = #tpu.pipeline_mode<synchronous>, transform_indices = @transform_0, window_bounds = array<i64: 32, 256>}, {transform_indices = @transform_1, window_bounds = array<i64: 256, 256>}, {transform_indices = @transform_2, window_bounds = array<i64: 1, 256>}, {transform_indices = @transform_3, window_bounds = array<i64: 32, 256>}]} {
    %c0 = arith.constant 0 : index
    %c0_0 = arith.constant 0 : index
    %0 = vector.load %arg1[%c0, %c0_0] : memref<32x256xbf16, #tpu.memory_space<vmem>>, vector<32x256xbf16>
    %c0_1 = arith.constant 0 : index
    %c0_2 = arith.constant 0 : index
    %1 = vector.load %arg2[%c0_1, %c0_2] : memref<256x256xbf16, #tpu.memory_space<vmem>>, vector<256x256xbf16>
    %cst = arith.constant dense<0.000000e+00> : vector<32x256xf32>
    %2 = tpu.matmul %0, %1, %cst {dimension_numbers = #tpu.dot_dimension_numbers<[1], [0], [0], [1], [0, 0, 1, 1], [], []>} : vector<32x256xbf16>, vector<256x256xbf16>, vector<32x256xf32> -> vector<32x256xf32>
    %c0_3 = arith.constant 0 : index
    %c0_4 = arith.constant 0 : index
    %3 = vector.load %arg3[%c0_3, %c0_4] : memref<1x256xf32, #tpu.memory_space<vmem>>, vector<1x256xf32>
    %4 = vector.broadcast %3 : vector<1x256xf32> to vector<32x256xf32>
    %5 = arith.addf %2, %4 : vector<32x256xf32>
    %cst_5 = arith.constant 0.000000e+00 : f32
    %6 = vector.broadcast %cst_5 : f32 to vector<32x256xf32>
    %7 = arith.maximumf %5, %6 : vector<32x256xf32>
    %c0_6 = arith.constant 0 : index
    %c0_7 = arith.constant 0 : index
    %8 = vector.load %arg4[%c0_6, %c0_7] : memref<32x256xf32, #tpu.memory_space<vmem>>, vector<32x256xf32>
    tpu.vector_store %arg4[%c0_6, %c0_7], %7 {strides = array<i32>} : memref<32x256xf32, #tpu.memory_space<vmem>>, vector<32x256xf32>,
    return
  }
  func.func @transform_0(%arg0: i32) -> (i32, i32) {
    %c0_i32 = arith.constant 0 : i32
    %c0_i32_0 = arith.constant 0 : i32
    %c0_i32_1 = arith.constant 0 : i32
    return %c0_i32, %c0_i32_0 : i32, i32
  }
  func.func @transform_1(%arg0: i32) -> (i32, i32) {
    %c0_i32 = arith.constant 0 : i32
    %c0_i32_0 = arith.constant 0 : i32
    return %c0_i32, %arg0 : i32, i32
  }
  func.func @transform_2(%arg0: i32) -> (i32, i32) {
    %c0_i32 = arith.constant 0 : i32
    %c0_i32_0 = arith.constant 0 : i32
    return %c0_i32, %arg0 : i32, i32
  }
  func.func @transform_3(%arg0: i32) -> (i32, i32) {
    %c0_i32 = arith.constant 0 : i32
    %c0_i32_0 = arith.constant 0 : i32
    return %c0_i32, %arg0 : i32, i32
  }
}

</mosaic_0001>

<llo_original>
// kernel: tpu_custom_call.1
$region0: #{tpu_custom_call.1}
  #allocation0 [shape = 'u32[]', space=smem, size = 0x4, offset = 0x4, fixed_abs, tag = 'smem constant byte address 0x4 - core index']
  #allocation1 [shape = 'u32[144,128]{1,0:T(1,128)}', space=vmem, size = 0x12000, scoped, tag = 'internal scratch']
  %s0 = inlined_call_operand.hbm [shape: bf16[32,256], index: 0, kind: input, shape index: {}]
  %s1 = inlined_call_operand.hbm [shape: bf16[256,256], index: 1, kind: input, shape index: {}]
  %s2 = inlined_call_operand.vmem [shape: f32[1,256], index: 2, kind: input, shape index: {}]
  %s3 = inlined_call_operand.hbm [shape: f32[32,256], index: 3, kind: output, shape index: {}]
  %s4 = sld [smem:[#allocation0]]
  $region30: #{tpu_custom_call.1} parent=0
    _
  %s6 = ssub.s32 1, %s4
  %s7 = scalar_select 0, %s6, %s4
  $region1: #{tpu_custom_call.1} parent=0
    #allocation2 [shape = 'u8[16384]{0}', space=vmem, size = 0x4000, scoped, tag = 'input window, operand 0, single buffered']
    #allocation3 [shape = 's32[1]{0}', space=sflag, size = 0x4, scoped, tag = 'scoped memory for tpu_custom_call.1']
    #allocation4 [shape = 's32[1]{0}', space=sflag, size = 0x4, scoped, tag = 'scoped memory for tpu_custom_call.1']
    #allocation5 [shape = 'u8[131072]{0}', space=vmem, size = 0x20000, scoped, tag = 'input window, operand 1, single buffered']
    #allocation6 [shape = 's32[1]{0}', space=sflag, size = 0x4, scoped, tag = 'scoped memory for tpu_custom_call.1']
    #allocation7 [shape = 'u8[32768]{0}', space=vmem, size = 0x8000, scoped, tag = 'output window, operand 0, single buffered']
    %8 = vsyncpa [#allocation3], 0
    %9 = vsyncpa [#allocation6], 0
    %10 = vsyncpa [#allocation4], 0
    // Predicated region
    $region2: #{tpu_custom_call.1} parent=1 // pred_check
      _
    $region3: #{tpu_custom_call.1} parent=1 // pred_check_branch
      %12 = sbr.rel (0) target = $region5
    $region4: #{tpu_custom_call.1} parent=1 // pred_region
      %s14 = ssub.s32 512, 512
      %15 = vsyncadd [#allocation3], %s14
      %s16 = sshll.u32 [#allocation2], 4
      %s17 = int_to_ptr.vmem [resolvable:$true] %s16
      %22 = dma.hbm_to_vmem [thread:$0]  %s0, 512, %s17, [#allocation3], 128, 128, 8
    $region5: #{tpu_custom_call.1} parent=1 // pred_fallthru
      _
    // Predicated region
    $region6: #{tpu_custom_call.1} parent=1 // pred_check
      _
    $region7: #{tpu_custom_call.1} parent=1 // pred_check_branch
      %24 = sbr.rel (0) target = $region9
    $region8: #{tpu_custom_call.1} parent=1 // pred_region
      %s26 = ssub.s32 4096, 4096
      %27 = vsyncadd [#allocation6], %s26
      %s28 = sshll.u32 [#allocation5], 4
      %s29 = int_to_ptr.vmem [resolvable:$true] %s28
      %34 = dma.hbm_to_vmem [thread:$0]  %s1, 4096, %s29, [#allocation6], 128, 128, 8
    $region9: #{tpu_custom_call.1} parent=1 // pred_fallthru
      _
    // Predicated region
    $region10: #{tpu_custom_call.1} parent=1 // pred_check
      _
    $region11: #{tpu_custom_call.1} parent=1 // pred_check_branch
      %36 = sbr.rel (0) target = $region13
    $region12: #{tpu_custom_call.1} parent=1 // pred_region
      _
    $region13: #{tpu_custom_call.1} parent=1 // pred_fallthru
      _
    // Predicated region
    $region14: #{tpu_custom_call.1} parent=1 // pred_check
      _
    $region15: #{tpu_custom_call.1} parent=1 // pred_check_branch
      %38 = sbr.rel (0) target = $region17
    $region16: #{tpu_custom_call.1} parent=1 // pred_region
      %39 = dma.done [#allocation3], 512
    $region17: #{tpu_custom_call.1} parent=1 // pred_fallthru
      _
    // Predicated region
    $region18: #{tpu_custom_call.1} parent=1 // pred_check
      _
    $region19: #{tpu_custom_call.1} parent=1 // pred_check_branch
      %41 = sbr.rel (0) target = $region21
    $region20: #{tpu_custom_call.1} parent=1 // pred_region
      %42 = dma.done [#allocation6], 4096
    $region21: #{tpu_custom_call.1} parent=1 // pred_fallthru
      _
    %v43 = vld [vmem:[#allocation2] sm:$0xff]
    %v44 = vld [vmem:[#allocation2 + $0x8] sm:$0xff]
    %v45 = vld [vmem:[#allocation2 + $0x10] sm:$0xff]
    %v46 = vld [vmem:[#allocation2 + $0x18] sm:$0xff]
    %v47 = vld [vmem:[#allocation5] sm:$0xff]
    %v48 = vld [vmem:[#allocation5 + $0x8] sm:$0xff]
    %v49 = vld [vmem:[#allocation5 + $0x10] sm:$0xff]
    %v50 = vld [vmem:[#allocation5 + $0x18] sm:$0xff]
    %v51 = vld [vmem:[#allocation5 + $0x20] sm:$0xff]
    %v52 = vld [vmem:[#allocation5 + $0x28] sm:$0xff]
    %v53 = vld [vmem:[#allocation5 + $0x30] sm:$0xff]
    %v54 = vld [vmem:[#allocation5 + $0x38] sm:$0xff]
    %v55 = vld [vmem:[#allocation5 + $0x40] sm:$0xff]
    %v56 = vld [vmem:[#allocation5 + $0x48] sm:$0xff]
    %v57 = vld [vmem:[#allocation5 + $0x50] sm:$0xff]
    %v58 = vld [vmem:[#allocation5 + $0x58] sm:$0xff]
    %v59 = vld [vmem:[#allocation5 + $0x60] sm:$0xff]
    %v60 = vld [vmem:[#allocation5 + $0x68] sm:$0xff]
    %v61 = vld [vmem:[#allocation5 + $0x70] sm:$0xff]
    %v62 = vld [vmem:[#allocation5 + $0x78] sm:$0xff]
    %v63 = vld [vmem:[#allocation5 + $0x80] sm:$0xff]
    %v64 = vld [vmem:[#allocation5 + $0x88] sm:$0xff]
    %v65 = vld [vmem:[#allocation5 + $0x90] sm:$0xff]
    %v66 = vld [vmem:[#allocation5 + $0x98] sm:$0xff]
    %v67 = vld [vmem:[#allocation5 + $0xa0] sm:$0xff]
    %v68 = vld [vmem:[#allocation5 + $0xa8] sm:$0xff]
    %v69 = vld [vmem:[#allocation5 + $0xb0] sm:$0xff]
    %v70 = vld [vmem:[#allocation5 + $0xb8] sm:$0xff]
    %v71 = vld [vmem:[#allocation5 + $0xc0] sm:$0xff]
    %v72 = vld [vmem:[#allocation5 + $0xc8] sm:$0xff]
    %v73 = vld [vmem:[#allocation5 + $0xd0] sm:$0xff]
    %v74 = vld [vmem:[#allocation5 + $0xd8] sm:$0xff]
    %v75 = vld [vmem:[#allocation5 + $0xe0] sm:$0xff]
    %v76 = vld [vmem:[#allocation5 + $0xe8] sm:$0xff]
    %v77 = vld [vmem:[#allocation5 + $0xf0] sm:$0xff]
    %v78 = vld [vmem:[#allocation5 + $0xf8] sm:$0xff]
    %v79 = vld [vmem:[%s2] sm:$0x3]
    %v81 = vlaneseq
    %v82 = vshrl.u32 %v81, 7
    %v83 = vsub.s32 0, %v82
    %v84 = vrot.slane %v79, %v83
    %v85 = vlaneseq
    %v86 = vshrl.u32 %v85, 7
    %v87 = vsub.s32 1, %v86
    %v88 = vrot.slane %v79, %v87
    %v95 = vunpack.c.l.b16 %v43
    %v96 = vunpack.c.h.b16 %v43
    %v97 = vunpack.c.l.b16 %v44
    %v98 = vunpack.c.h.b16 %v44
    %v99 = vunpack.c.l.b16 %v45
    %v100 = vunpack.c.h.b16 %v45
    %v101 = vunpack.c.l.b16 %v46
    %v102 = vunpack.c.h.b16 %v46
    %v103 = vpack.c.b16 %v97, %v95
    %v104 = vpack.c.b16 %v98, %v96
    %v105 = vpack.c.b16 %v101, %v99
    %v106 = vpack.c.b16 %v102, %v100
    %v143 = vunpack.c.l.b16 %v47
    %v144 = vunpack.c.h.b16 %v47
    %v145 = vunpack.c.l.b16 %v48
    %v146 = vunpack.c.h.b16 %v48
    %v147 = vunpack.c.l.b16 %v49
    %v148 = vunpack.c.h.b16 %v49
    %v149 = vunpack.c.l.b16 %v50
    %v150 = vunpack.c.h.b16 %v50
    %v151 = vunpack.c.l.b16 %v51
    %v152 = vunpack.c.h.b16 %v51
    %v153 = vunpack.c.l.b16 %v52
    %v154 = vunpack.c.h.b16 %v52
    %v155 = vunpack.c.l.b16 %v53
    %v156 = vunpack.c.h.b16 %v53
    %v157 = vunpack.c.l.b16 %v54
    %v158 = vunpack.c.h.b16 %v54
    %v159 = vunpack.c.l.b16 %v55
    %v160 = vunpack.c.h.b16 %v55
    %v161 = vunpack.c.l.b16 %v56
    %v162 = vunpack.c.h.b16 %v56
    %v163 = vunpack.c.l.b16 %v57
    %v164 = vunpack.c.h.b16 %v57
    %v165 = vunpack.c.l.b16 %v58
    %v166 = vunpack.c.h.b16 %v58
    %v167 = vunpack.c.l.b16 %v59
    %v168 = vunpack.c.h.b16 %v59
    %v169 = vunpack.c.l.b16 %v60
    %v170 = vunpack.c.h.b16 %v60
    %v171 = vunpack.c.l.b16 %v61
    %v172 = vunpack.c.h.b16 %v61
    %v173 = vunpack.c.l.b16 %v62
    %v174 = vunpack.c.h.b16 %v62
    %v175 = vunpack.c.l.b16 %v63
    %v176 = vunpack.c.h.b16 %v63
    %v177 = vunpack.c.l.b16 %v64
    %v178 = vunpack.c.h.b16 %v64
    %v179 = vunpack.c.l.b16 %v65
    %v180 = vunpack.c.h.b16 %v65
    %v181 = vunpack.c.l.b16 %v66
    %v182 = vunpack.c.h.b16 %v66
    %v183 = vunpack.c.l.b16 %v67
    %v184 = vunpack.c.h.b16 %v67
    %v185 = vunpack.c.l.b16 %v68
    %v186 = vunpack.c.h.b16 %v68
    %v187 = vunpack.c.l.b16 %v69
    %v188 = vunpack.c.h.b16 %v69
    %v189 = vunpack.c.l.b16 %v70
    %v190 = vunpack.c.h.b16 %v70
    %v191 = vunpack.c.l.b16 %v71
    %v192 = vunpack.c.h.b16 %v71
    %v193 = vunpack.c.l.b16 %v72
    %v194 = vunpack.c.h.b16 %v72
    %v195 = vunpack.c.l.b16 %v73
    %v196 = vunpack.c.h.b16 %v73
    %v197 = vunpack.c.l.b16 %v74
    %v198 = vunpack.c.h.b16 %v74
    %v199 = vunpack.c.l.b16 %v75
    %v200 = vunpack.c.h.b16 %v75
    %v201 = vunpack.c.l.b16 %v76
    %v202 = vunpack.c.h.b16 %v76
    %v203 = vunpack.c.l.b16 %v77
    %v204 = vunpack.c.h.b16 %v77
    %v205 = vunpack.c.l.b16 %v78
    %v206 = vunpack.c.h.b16 %v78
    %v207 = vpack.c.b16 %v145, %v143
    %v208 = vpack.c.b16 %v146, %v144
    %v209 = vpack.c.b16 %v149, %v147
    %v210 = vpack.c.b16 %v150, %v148
    %v211 = vpack.c.b16 %v153, %v151
    %v212 = vpack.c.b16 %v154, %v152
    %v213 = vpack.c.b16 %v157, %v155
    %v214 = vpack.c.b16 %v158, %v156
    %v215 = vpack.c.b16 %v161, %v159
    %v216 = vpack.c.b16 %v162, %v160
    %v217 = vpack.c.b16 %v165, %v163
    %v218 = vpack.c.b16 %v166, %v164
    %v219 = vpack.c.b16 %v169, %v167
    %v220 = vpack.c.b16 %v170, %v168
    %v221 = vpack.c.b16 %v173, %v171
    %v222 = vpack.c.b16 %v174, %v172
    %v223 = vpack.c.b16 %v177, %v175
    %v224 = vpack.c.b16 %v178, %v176
    %v225 = vpack.c.b16 %v181, %v179
    %v226 = vpack.c.b16 %v182, %v180
    %v227 = vpack.c.b16 %v185, %v183
    %v228 = vpack.c.b16 %v186, %v184
    %v229 = vpack.c.b16 %v189, %v187
    %v230 = vpack.c.b16 %v190, %v188
    %v231 = vpack.c.b16 %v193, %v191
    %v232 = vpack.c.b16 %v194, %v192
    %v233 = vpack.c.b16 %v197, %v195
    %v234 = vpack.c.b16 %v198, %v196
    %v235 = vpack.c.b16 %v201, %v199
    %v236 = vpack.c.b16 %v202, %v200
    %v237 = vpack.c.b16 %v205, %v203
    %v238 = vpack.c.b16 %v206, %v204
    %271 = vmatprep.subr.bf16.mxu0 %v208
    %272 = vmatpush1.bf16.msra.mxu0 %v207
    %273 = vmatprep.subr.bf16.mxu0 %v210
    %274 = vmatpush1.bf16.msra.mxu0 %v209
    %275 = vmatprep.subr.bf16.mxu0 %v212
    %276 = vmatpush1.bf16.msra.mxu0 %v211
    %277 = vmatprep.subr.bf16.mxu0 %v214
    %278 = vmatpush1.bf16.msra.mxu0 %v213
    %279 = vmatprep.subr.bf16.mxu0 %v216
    %280 = vmatpush1.bf16.msra.mxu0 %v215
    %281 = vmatprep.subr.bf16.mxu0 %v218
    %282 = vmatpush1.bf16.msra.mxu0 %v217
    %283 = vmatprep.subr.bf16.mxu0 %v220
    %284 = vmatpush1.bf16.msra.mxu0 %v219
    %285 = vmatprep.subr.bf16.mxu0 %v222
    %286 = vmatpush1.bf16.msra.mxu0 %v221
    %287 = vmatprep.subr.bf16.mxu0 %v224
    %288 = vmatpush1.bf16.msra.mxu0 %v223
    %289 = vmatprep.subr.bf16.mxu0 %v226
    %290 = vmatpush1.bf16.msra.mxu0 %v225
    %291 = vmatprep.subr.bf16.mxu0 %v228
    %292 = vmatpush1.bf16.msra.mxu0 %v227
    %293 = vmatprep.subr.bf16.mxu0 %v230
    %294 = vmatpush1.bf16.msra.mxu0 %v229
    %295 = vmatprep.subr.bf16.mxu0 %v232
    %296 = vmatpush1.bf16.msra.mxu0 %v231
    %297 = vmatprep.subr.bf16.mxu0 %v234
    %298 = vmatpush1.bf16.msra.mxu0 %v233
    %299 = vmatprep.subr.bf16.mxu0 %v236
    %300 = vmatpush1.bf16.msra.mxu0 %v235
    %301 = vmatprep.subr.bf16.mxu0 %v238
    %302 = vmatpush1.bf16.msra.mxu0 %v237
    %303 = vmatprep.mubr.bf16.mxu0 %v104
    %304 = vmatmul.mubr.bf16.gmra.mrb[0].mxu0 %v103
    %v305 = vpop.f32.mrb[0].mxu0
    %v306 = vadd.f32 %v84, %v305
    %v307 = vpop.f32.mrb[0].mxu0
    %v308 = vadd.f32 %v88, %v307
    %v309 = vpop.f32.mrb[0].mxu0
    %v310 = vadd.f32 %v84, %v309
    %v311 = vpop.f32.mrb[0].mxu0
    %v312 = vadd.f32 %v88, %v311
    %313 = vmatprep.mubr.bf16.mxu0 %v106
    %314 = vmatmul.mubr.bf16.gmra.mrb[0].mxu0 %v105
    %v315 = vpop.f32.mrb[0].mxu0
    %v316 = vadd.f32 %v84, %v315
    %v317 = vpop.f32.mrb[0].mxu0
    %v318 = vadd.f32 %v88, %v317
    %v319 = vpop.f32.mrb[0].mxu0
    %v320 = vadd.f32 %v84, %v319
    %v321 = vpop.f32.mrb[0].mxu0
    %v322 = vadd.f32 %v88, %v321
    %323 = vdwg.mxu0
    %v324 = vmax.f32 %v306, 0.0
    %v325 = vmax.f32 %v308, 0.0
    %v326 = vmax.f32 %v310, 0.0
    %v327 = vmax.f32 %v312, 0.0
    %v328 = vmax.f32 %v316, 0.0
    %v329 = vmax.f32 %v318, 0.0
    %v330 = vmax.f32 %v320, 0.0
    %v331 = vmax.f32 %v322, 0.0
    %332 = vst [vmem:[#allocation7] sm:$0xff] %v324
    %333 = vst [vmem:[#allocation7 + $0x8] sm:$0xff] %v325
    %334 = vst [vmem:[#allocation7 + $0x10] sm:$0xff] %v326
    %335 = vst [vmem:[#allocation7 + $0x18] sm:$0xff] %v327
    %336 = vst [vmem:[#allocation7 + $0x20] sm:$0xff] %v328
    %337 = vst [vmem:[#allocation7 + $0x28] sm:$0xff] %v329
    %338 = vst [vmem:[#allocation7 + $0x30] sm:$0xff] %v330
    %339 = vst [vmem:[#allocation7 + $0x38] sm:$0xff] %v331
    // Predicated region
    $region22: #{tpu_custom_call.1} parent=1 // pred_check
      _
    $region23: #{tpu_custom_call.1} parent=1 // pred_check_branch
      %341 = sbr.rel (0) target = $region25
    $region24: #{tpu_custom_call.1} parent=1 // pred_region
      %s343 = ssub.s32 1024, 1024
      %344 = vsyncadd [#allocation4], %s343
      %s345 = sshll.u32 [#allocation7], 4
      %s346 = int_to_ptr.vmem [resolvable:$true] %s345
      %351 = dma.vmem_to_hbm [thread:$0]  %s346, 1024, %s3, [#allocation4], 256, 256, 16
    $region25: #{tpu_custom_call.1} parent=1 // pred_fallthru
      _
    // Predicated region
    $region26: #{tpu_custom_call.1} parent=1 // pred_check
      _
    $region27: #{tpu_custom_call.1} parent=1 // pred_check_branch
      %353 = sbr.rel (0) target = $region29
    $region28: #{tpu_custom_call.1} parent=1 // pred_region
      %354 = dma.done [#allocation4], 1024
    $region29: #{tpu_custom_call.1} parent=1 // pred_fallthru
      _
    %355 = vsyncpa [#allocation3], 1
    %356 = vsyncpa [#allocation6], 1
    %357 = vsyncpa [#allocation4], 1

</llo_original>
